<compile_context>
chip_gen: v6e
topology: v6e:2x2x1
jax: 0.10.0
libtpu: 0.0.40
codegen_flags: <defaults>
</compile_context>

<pallas_src>
import functools

import jax
import jax.numpy as jnp
from jax.experimental import pallas as pl
from jax.experimental.pallas import tpu as pltpu


HIDDEN = 256
LANE = 128
SUBLANE = 8


def _round_up(x, m):
    return (x + m - 1) // m * m


def _select_batch_tile(batch, block_b):
    """Pick the batch tile: one full tile for small batches, >=2 fat tiles otherwise."""
    if batch <= 256:
        return batch                              # single full-dim tile
    n_tiles = max(2, pl.cdiv(batch, block_b))     # >=2 so megacore gets work
    return min(batch, _round_up(pl.cdiv(batch, n_tiles), SUBLANE))


def _actorg_kernel(max_action, out_lane,
                   xa_ref,
                   w1_ref, b1_ref,
                   w2_ref, b2_ref,
                   w3_ref, b3_ref,
                   w4_ref, b4_ref,
                   out_ref):
    """One batch tile of the full forward pass (weights resident in VMEM)."""
    xa = xa_ref[...]                               # [tb, in_lane] f32; lanes [0:act_dim] = act
    xa_bf = xa.astype(jnp.bfloat16)

    # fc1 + relu (single lane-padded K=in_lane matmul; concat + pad fused into w1 layout)
    h = jnp.dot(xa_bf, w1_ref[...], preferred_element_type=jnp.float32) + b1_ref[...]
    h = jnp.maximum(h, 0.0).astype(jnp.bfloat16)

    # fc2 + relu
    h = jnp.dot(h, w2_ref[...], preferred_element_type=jnp.float32) + b2_ref[...]
    h = jnp.maximum(h, 0.0).astype(jnp.bfloat16)

    # fc3 + relu
    h = jnp.dot(h, w3_ref[...], preferred_element_type=jnp.float32) + b3_ref[...]
    h = jnp.maximum(h, 0.0).astype(jnp.bfloat16)

    # action_out (lane-padded) + scaled tanh
    logits = jnp.dot(h, w4_ref[...], preferred_element_type=jnp.float32) + b4_ref[...]
    actions = (0.05 * max_action) * jnp.tanh(logits)          # [tb, out_lane]

    # Residual + clamp over the full lane-dense slab; only lanes [0:act_dim]
    # are meaningful (act sits there in the input slab), the rest is discarded
    # by the wrapper slice, so the extra lanes ride otherwise-idle VPU slots.
    res = xa if xa.shape[-1] == out_lane else xa[:, :out_lane]
    out_ref[...] = jnp.clip(res + actions, -max_action, max_action)


def actorg_forward(x, act, params, max_action, *, block_b=1024):
    """x: [B, obs+goal] f32, act: [B, action] f32.  Returns [B, action] f32."""
    batch, act_dim = act.shape
    in_x = x.shape[-1]
    in_lane, hidden = params["w1"].shape
    out_lane = params["w4"].shape[1]

    # Lane-dense layer-1 input slab: [act | x | zeros] -> [B, in_lane] f32.
    slab = jnp.concatenate([act, x], axis=-1)
    k = in_x + act_dim
    if k < in_lane:
        slab = jnp.pad(slab, ((0, 0), (0, in_lane - k)))

    tb = _select_batch_tile(batch, block_b)
    grid = (pl.cdiv(batch, tb),)

    row_spec = lambda lanes: pl.BlockSpec((tb, lanes), lambda i: (i, 0))
    const_spec = lambda shp: pl.BlockSpec(shp, lambda i: (0, 0))

    flops = 2 * batch * (in_lane * hidden + 2 * hidden * hidden + hidden * out_lane)
    weight_bytes = 2 * (in_lane * hidden + 2 * hidden * hidden + hidden * out_lane)
    bias_bytes = 4 * (3 * hidden + out_lane)
    io_bytes = 4 * batch * (in_lane + out_lane)
    cost = pl.CostEstimate(flops=int(flops),
                           transcendentals=int(batch * out_lane),
                           bytes_accessed=int(weight_bytes + bias_bytes + io_bytes))

    kernel = functools.partial(_actorg_kernel, float(max_action), out_lane)
    out = pl.pallas_call(
        kernel,
        out_shape=jax.ShapeDtypeStruct((batch, out_lane), jnp.float32),
        grid=grid,
        in_specs=[
            row_spec(in_lane),                      # xa slab
            const_spec((in_lane, hidden)),          # w1 (padded, slab-ordered)
            const_spec((1, hidden)),                # b1
            const_spec((hidden, hidden)),           # w2
            const_spec((1, hidden)),                # b2
            const_spec((hidden, hidden)),           # w3
            const_spec((1, hidden)),                # b3
            const_spec((hidden, out_lane)),         # w4 (lane-padded)
            const_spec((1, out_lane)),              # b4 (lane-padded)
        ],
        out_specs=row_spec(out_lane),
        compiler_params=pltpu.CompilerParams(
            dimension_semantics=("parallel",)),
        cost_estimate=cost,
    )(slab,
      params["w1"], params["b1"],
      params["w2"], params["b2"],
      params["w3"], params["b3"],
      params["w4"], params["b4"])

    return out[:, :act_dim]


def _xavier_uniform(key, fan_in, fan_out):
    limit = (6.0 / (fan_in + fan_out)) ** 0.5
    return jax.random.uniform(key, (fan_in, fan_out), jnp.float32, -limit, limit)


def init_actorg_params(key, obs, goal, action):
    """Xavier-uniform weights (bias = 0), stored in the kernel's padded layout.

    w1: [in_lane, 256] bf16, rows ordered to match the [act | x | zeros] slab.
    w4/b4: zero-padded to out_lane (>=128) output lanes.
    """
    in_x = obs + goal
    in_dim = in_x + action
    in_lane = max(LANE, _round_up(in_dim, LANE))
    out_lane = max(LANE, _round_up(action, LANE))

    k1, k2, k3, k4 = jax.random.split(key, 4)

    w1 = _xavier_uniform(k1, in_dim, HIDDEN)          # rows 0..in_x-1: x, rows in_x..: act
    w1_pad = jnp.zeros((in_lane, HIDDEN), jnp.float32)
    w1_pad = w1_pad.at[:action].set(w1[in_x:])        # act rows -> slab lanes [0:action]
    w1_pad = w1_pad.at[action:action + in_x].set(w1[:in_x])

    w4 = _xavier_uniform(k4, HIDDEN, action)
    w4_pad = jnp.zeros((HIDDEN, out_lane), jnp.float32).at[:, :action].set(w4)

    return {
        "w1": w1_pad.astype(jnp.bfloat16),
        "b1": jnp.zeros((1, HIDDEN), jnp.float32),
        "w2": _xavier_uniform(k2, HIDDEN, HIDDEN).astype(jnp.bfloat16),
        "b2": jnp.zeros((1, HIDDEN), jnp.float32),
        "w3": _xavier_uniform(k3, HIDDEN, HIDDEN).astype(jnp.bfloat16),
        "b3": jnp.zeros((1, HIDDEN), jnp.float32),
        "w4": w4_pad.astype(jnp.bfloat16),
        "b4": jnp.zeros((1, out_lane), jnp.float32),
    }


def _ref_forward(x, act, params, max_action):
    """Pure-JAX reference with identical bf16-weight / f32-accum arithmetic,
    written in the original (unpadded) concat form to validate the padded layout."""
    in_x = x.shape[-1]
    act_dim = act.shape[-1]
    w1_a = params["w1"][:act_dim]
    w1_x = params["w1"][act_dim:act_dim + in_x]
    xb = x.astype(jnp.bfloat16)
    ab = act.astype(jnp.bfloat16)
    h = (jnp.dot(xb, w1_x, preferred_element_type=jnp.float32)
         + jnp.dot(ab, w1_a, preferred_element_type=jnp.float32)
         + params["b1"])
    h = jnp.maximum(h, 0.0).astype(jnp.bfloat16)
    h = jnp.dot(h, params["w2"], preferred_element_type=jnp.float32) + params["b2"]
    h = jnp.maximum(h, 0.0).astype(jnp.bfloat16)
    h = jnp.dot(h, params["w3"], preferred_element_type=jnp.float32) + params["b3"]
    h = jnp.maximum(h, 0.0).astype(jnp.bfloat16)
    logits = (jnp.dot(h, params["w4"][:, :act_dim], preferred_element_type=jnp.float32)
              + params["b4"][:, :act_dim])
    actions = 0.05 * max_action * jnp.tanh(logits)
    return jnp.clip(act + actions, -max_action, max_action)


if __name__ == "__main__":
    # Small env_params: obs=10, goal=3, action=4, action_max=1.0.
    obs_dim, goal_dim, action_dim = 10, 3, 4
    max_action = 1.0

    key = jax.random.PRNGKey(0)
    k_params, k_x, k_act, k_x2, k_act2 = jax.random.split(key, 5)
    params = init_actorg_params(k_params, obs_dim, goal_dim, action_dim)

    # Case 1: tiny batch (single full-dim tile, grid=(1,)).
    batch = 8
    x = jax.random.normal(k_x, (batch, obs_dim + goal_dim), jnp.float32)
    act = jax.random.uniform(k_act, (batch, action_dim), jnp.float32,
                             -max_action, max_action)
    out = actorg_forward(x, act, params, max_action)
    jax.block_until_ready(out)
    ref = _ref_forward(x, act, params, max_action)
    assert out.shape == (batch, action_dim)
    assert jnp.allclose(out, ref, atol=2e-4, rtol=2e-4), (
        f"max abs diff = {jnp.max(jnp.abs(out - ref))}")

    # Case 2: moderate batch that doesn't divide the tile (exercises the
    # 2-tile megacore split and the ragged last block with no wrapper pad).
    batch2 = 300
    x2 = jax.random.normal(k_x2, (batch2, obs_dim + goal_dim), jnp.float32)
    act2 = jax.random.uniform(k_act2, (batch2, action_dim), jnp.float32,
                              -max_action, max_action)
    out2 = actorg_forward(x2, act2, params, max_action)
    jax.block_until_ready(out2)
    ref2 = _ref_forward(x2, act2, params, max_action)
    assert out2.shape == (batch2, action_dim)
    assert jnp.allclose(out2, ref2, atol=2e-4, rtol=2e-4), (
        f"max abs diff = {jnp.max(jnp.abs(out2 - ref2))}")

    print("KERNEL_OK")
</pallas_src>

<mosaic_0001>
module attributes {stable_mosaic.version = 11 : i64} {
  func.func @_actorg_kernel(%arg0: i32, %arg1: memref<8x128xf32, #tpu.memory_space<vmem>>, %arg2: memref<128x256xbf16, #tpu.memory_space<vmem>>, %arg3: memref<1x256xf32, #tpu.memory_space<vmem>>, %arg4: memref<256x256xbf16, #tpu.memory_space<vmem>>, %arg5: memref<1x256xf32, #tpu.memory_space<vmem>>, %arg6: memref<256x256xbf16, #tpu.memory_space<vmem>>, %arg7: memref<1x256xf32, #tpu.memory_space<vmem>>, %arg8: memref<256x128xbf16, #tpu.memory_space<vmem>>, %arg9: memref<1x128xf32, #tpu.memory_space<vmem>>, %arg10: memref<8x128xf32, #tpu.memory_space<vmem>>) attributes {dimension_semantics = [#tpu.dimension_semantics<parallel>], iteration_bounds = array<i64: 1>, scalar_prefetch = 0 : i64, scratch_operands = 0 : i64, tpu.core_type = #tpu.core_type<tc>, window_params = [{transform_indices = @transform_0, window_bounds = array<i64: 8, 128>}, {pipeline_mode = #tpu.pipeline_mode<synchronous>, transform_indices = @transform_1, window_bounds = array<i64: 128, 256>}, {pipeline_mode = #tpu.pipeline_mode<synchronous>, transform_indices = @transform_2, window_bounds = array<i64: 1, 256>}, {pipeline_mode = #tpu.pipeline_mode<synchronous>, transform_indices = @transform_3, window_bounds = array<i64: 256, 256>}, {pipeline_mode = #tpu.pipeline_mode<synchronous>, transform_indices = @transform_4, window_bounds = array<i64: 1, 256>}, {pipeline_mode = #tpu.pipeline_mode<synchronous>, transform_indices = @transform_5, window_bounds = array<i64: 256, 256>}, {pipeline_mode = #tpu.pipeline_mode<synchronous>, transform_indices = @transform_6, window_bounds = array<i64: 1, 256>}, {pipeline_mode = #tpu.pipeline_mode<synchronous>, transform_indices = @transform_7, window_bounds = array<i64: 256, 128>}, {pipeline_mode = #tpu.pipeline_mode<synchronous>, transform_indices = @transform_8, window_bounds = array<i64: 1, 128>}, {transform_indices = @transform_9, window_bounds = array<i64: 8, 128>}]} {
    %c0 = arith.constant 0 : index
    %c0_0 = arith.constant 0 : index
    %0 = vector.load %arg1[%c0, %c0_0] : memref<8x128xf32, #tpu.memory_space<vmem>>, vector<8x128xf32>
    %1 = arith.truncf %0 : vector<8x128xf32> to vector<8x128xbf16>
    %c0_1 = arith.constant 0 : index
    %c0_2 = arith.constant 0 : index
    %2 = vector.load %arg2[%c0_1, %c0_2] : memref<128x256xbf16, #tpu.memory_space<vmem>>, vector<128x256xbf16>
    %cst = arith.constant dense<0.000000e+00> : vector<8x256xf32>
    %3 = tpu.matmul %1, %2, %cst {dimension_numbers = #tpu.dot_dimension_numbers<[1], [0], [0], [1], [0, 0, 1, 1], [], []>} : vector<8x128xbf16>, vector<128x256xbf16>, vector<8x256xf32> -> vector<8x256xf32>
    %c0_3 = arith.constant 0 : index
    %c0_4 = arith.constant 0 : index
    %4 = vector.load %arg3[%c0_3, %c0_4] : memref<1x256xf32, #tpu.memory_space<vmem>>, vector<1x256xf32>
    %5 = vector.broadcast %4 : vector<1x256xf32> to vector<8x256xf32>
    %6 = arith.addf %3, %5 : vector<8x256xf32>
    %cst_5 = arith.constant 0.000000e+00 : f32
    %7 = vector.broadcast %cst_5 : f32 to vector<8x256xf32>
    %8 = arith.maximumf %6, %7 : vector<8x256xf32>
    %9 = arith.truncf %8 : vector<8x256xf32> to vector<8x256xbf16>
    %c0_6 = arith.constant 0 : index
    %c0_7 = arith.constant 0 : index
    %10 = vector.load %arg4[%c0_6, %c0_7] : memref<256x256xbf16, #tpu.memory_space<vmem>>, vector<256x256xbf16>
    %cst_8 = arith.constant dense<0.000000e+00> : vector<8x256xf32>
    %11 = tpu.matmul %9, %10, %cst_8 {dimension_numbers = #tpu.dot_dimension_numbers<[1], [0], [0], [1], [0, 0, 1, 1], [], []>} : vector<8x256xbf16>, vector<256x256xbf16>, vector<8x256xf32> -> vector<8x256xf32>
    %c0_9 = arith.constant 0 : index
    %c0_10 = arith.constant 0 : index
    %12 = vector.load %arg5[%c0_9, %c0_10] : memref<1x256xf32, #tpu.memory_space<vmem>>, vector<1x256xf32>
    %13 = vector.broadcast %12 : vector<1x256xf32> to vector<8x256xf32>
    %14 = arith.addf %11, %13 : vector<8x256xf32>
    %cst_11 = arith.constant 0.000000e+00 : f32
    %15 = vector.broadcast %cst_11 : f32 to vector<8x256xf32>
    %16 = arith.maximumf %14, %15 : vector<8x256xf32>
    %17 = arith.truncf %16 : vector<8x256xf32> to vector<8x256xbf16>
    %c0_12 = arith.constant 0 : index
    %c0_13 = arith.constant 0 : index
    %18 = vector.load %arg6[%c0_12, %c0_13] : memref<256x256xbf16, #tpu.memory_space<vmem>>, vector<256x256xbf16>
    %cst_14 = arith.constant dense<0.000000e+00> : vector<8x256xf32>
    %19 = tpu.matmul %17, %18, %cst_14 {dimension_numbers = #tpu.dot_dimension_numbers<[1], [0], [0], [1], [0, 0, 1, 1], [], []>} : vector<8x256xbf16>, vector<256x256xbf16>, vector<8x256xf32> -> vector<8x256xf32>
    %c0_15 = arith.constant 0 : index
    %c0_16 = arith.constant 0 : index
    %20 = vector.load %arg7[%c0_15, %c0_16] : memref<1x256xf32, #tpu.memory_space<vmem>>, vector<1x256xf32>
    %21 = vector.broadcast %20 : vector<1x256xf32> to vector<8x256xf32>
    %22 = arith.addf %19, %21 : vector<8x256xf32>
    %cst_17 = arith.constant 0.000000e+00 : f32
    %23 = vector.broadcast %cst_17 : f32 to vector<8x256xf32>
    %24 = arith.maximumf %22, %23 : vector<8x256xf32>
    %25 = arith.truncf %24 : vector<8x256xf32> to vector<8x256xbf16>
    %c0_18 = arith.constant 0 : index
    %c0_19 = arith.constant 0 : index
    %26 = vector.load %arg8[%c0_18, %c0_19] : memref<256x128xbf16, #tpu.memory_space<vmem>>, vector<256x128xbf16>
    %cst_20 = arith.constant dense<0.000000e+00> : vector<8x128xf32>
    %27 = tpu.matmul %25, %26, %cst_20 {dimension_numbers = #tpu.dot_dimension_numbers<[1], [0], [0], [1], [0, 0, 1, 1], [], []>} : vector<8x256xbf16>, vector<256x128xbf16>, vector<8x128xf32> -> vector<8x128xf32>
    %c0_21 = arith.constant 0 : index
    %c0_22 = arith.constant 0 : index
    %28 = vector.load %arg9[%c0_21, %c0_22] : memref<1x128xf32, #tpu.memory_space<vmem>>, vector<1x128xf32>
    %29 = vector.broadcast %28 : vector<1x128xf32> to vector<8x128xf32>
    %30 = arith.addf %27, %29 : vector<8x128xf32>
    %31 = math.tanh %30 : vector<8x128xf32>
    %cst_23 = arith.constant 5.000000e-02 : f32
    %32 = vector.broadcast %cst_23 : f32 to vector<8x128xf32>
    %33 = arith.mulf %32, %31 : vector<8x128xf32>
    %34 = arith.addf %0, %33 : vector<8x128xf32>
    %cst_24 = arith.constant -1.000000e+00 : f32
    %cst_25 = arith.constant 1.000000e+00 : f32
    %35 = vector.broadcast %cst_24 : f32 to vector<8x128xf32>
    %36 = arith.maximumf %35, %34 : vector<8x128xf32>
    %37 = vector.broadcast %cst_25 : f32 to vector<8x128xf32>
    %38 = arith.minimumf %37, %36 : vector<8x128xf32>
    %c0_26 = arith.constant 0 : index
    %c0_27 = arith.constant 0 : index
    %39 = vector.load %arg10[%c0_26, %c0_27] : memref<8x128xf32, #tpu.memory_space<vmem>>, vector<8x128xf32>
    tpu.vector_store %arg10[%c0_26, %c0_27], %38 {strides = array<i32>} : memref<8x128xf32, #tpu.memory_space<vmem>>, vector<8x128xf32>,
    return
  }
  func.func @transform_0(%arg0: i32) -> (i32, i32) {
    %c0_i32 = arith.constant 0 : i32
    %c0_i32_0 = arith.constant 0 : i32
    return %arg0, %c0_i32 : i32, i32
  }
  func.func @transform_1(%arg0: i32) -> (i32, i32) {
    %c0_i32 = arith.constant 0 : i32
    %c0_i32_0 = arith.constant 0 : i32
    %c0_i32_1 = arith.constant 0 : i32
    return %c0_i32, %c0_i32_0 : i32, i32
  }
  func.func @transform_2(%arg0: i32) -> (i32, i32) {
    %c0_i32 = arith.constant 0 : i32
    %c0_i32_0 = arith.constant 0 : i32
    %c0_i32_1 = arith.constant 0 : i32
    return %c0_i32, %c0_i32_0 : i32, i32
  }
  func.func @transform_3(%arg0: i32) -> (i32, i32) {
    %c0_i32 = arith.constant 0 : i32
    %c0_i32_0 = arith.constant 0 : i32
    %c0_i32_1 = arith.constant 0 : i32
    return %c0_i32, %c0_i32_0 : i32, i32
  }
  func.func @transform_4(%arg0: i32) -> (i32, i32) {
    %c0_i32 = arith.constant 0 : i32
    %c0_i32_0 = arith.constant 0 : i32
    %c0_i32_1 = arith.constant 0 : i32
    return %c0_i32, %c0_i32_0 : i32, i32
  }
  func.func @transform_5(%arg0: i32) -> (i32, i32) {
    %c0_i32 = arith.constant 0 : i32
    %c0_i32_0 = arith.constant 0 : i32
    %c0_i32_1 = arith.constant 0 : i32
    return %c0_i32, %c0_i32_0 : i32, i32
  }
  func.func @transform_6(%arg0: i32) -> (i32, i32) {
    %c0_i32 = arith.constant 0 : i32
    %c0_i32_0 = arith.constant 0 : i32
    %c0_i32_1 = arith.constant 0 : i32
    return %c0_i32, %c0_i32_0 : i32, i32
  }
  func.func @transform_7(%arg0: i32) -> (i32, i32) {
    %c0_i32 = arith.constant 0 : i32
    %c0_i32_0 = arith.constant 0 : i32
    %c0_i32_1 = arith.constant 0 : i32
    return %c0_i32, %c0_i32_0 : i32, i32
  }
  func.func @transform_8(%arg0: i32) -> (i32, i32) {
    %c0_i32 = arith.constant 0 : i32
    %c0_i32_0 = arith.constant 0 : i32
    %c0_i32_1 = arith.constant 0 : i32
    return %c0_i32, %c0_i32_0 : i32, i32
  }
  func.func @transform_9(%arg0: i32) -> (i32, i32) {
    %c0_i32 = arith.constant 0 : i32
    %c0_i32_0 = arith.constant 0 : i32
    return %arg0, %c0_i32 : i32, i32
  }
}

</mosaic_0001>

<llo_original>
// kernel: tpu_custom_call.1
$region0: #{tpu_custom_call.1}
  #allocation0 [shape = 'u32[]', space=smem, size = 0x4, offset = 0x4, fixed_abs, tag = 'smem constant byte address 0x4 - core index']
  #allocation1 [shape = 'u32[144,128]{1,0:T(1,128)}', space=vmem, size = 0x12000, scoped, tag = 'internal scratch']
  %s0 = inlined_call_operand.hbm [shape: f32[8,128], index: 0, kind: input, shape index: {}]
  %s1 = inlined_call_operand.hbm [shape: bf16[128,256], index: 1, kind: input, shape index: {}]
  %s2 = inlined_call_operand.vmem [shape: f32[1,256], index: 2, kind: input, shape index: {}]
  %s3 = inlined_call_operand.hbm [shape: bf16[256,256], index: 3, kind: input, shape index: {}]
  %s4 = inlined_call_operand.vmem [shape: f32[1,256], index: 4, kind: input, shape index: {}]
  %s5 = inlined_call_operand.hbm [shape: bf16[256,256], index: 5, kind: input, shape index: {}]
  %s6 = inlined_call_operand.vmem [shape: f32[1,256], index: 6, kind: input, shape index: {}]
  %s7 = inlined_call_operand.hbm [shape: bf16[256,128], index: 7, kind: input, shape index: {}]
  %s8 = inlined_call_operand.vmem [shape: f32[1,128], index: 8, kind: input, shape index: {}]
  %s9 = inlined_call_operand.hbm [shape: f32[8,128], index: 9, kind: output, shape index: {}]
  %s10 = sld [smem:[#allocation0]]
  $region66: #{tpu_custom_call.1} parent=0
    _
  %s12 = ssub.s32 1, %s10
  %s13 = scalar_select 0, %s12, %s10
  $region1: #{tpu_custom_call.1} parent=0
    #allocation2 [shape = 'u8[4096]{0}', space=vmem, size = 0x1000, scoped, tag = 'input window, operand 0, single buffered']
    #allocation3 [shape = 's32[1]{0}', space=sflag, size = 0x4, scoped, tag = 'scoped memory for tpu_custom_call.1']
    #allocation4 [shape = 's32[1]{0}', space=sflag, size = 0x4, scoped, tag = 'scoped memory for tpu_custom_call.1']
    #allocation5 [shape = 'u8[65536]{0}', space=vmem, size = 0x10000, scoped, tag = 'input window, operand 1, single buffered']
    #allocation6 [shape = 's32[1]{0}', space=sflag, size = 0x4, scoped, tag = 'scoped memory for tpu_custom_call.1']
    #allocation7 [shape = 'u8[131072]{0}', space=vmem, size = 0x20000, scoped, tag = 'input window, operand 3, single buffered']
    #allocation8 [shape = 'u8[131072]{0}', space=vmem, size = 0x20000, scoped, tag = 'input window, operand 5, single buffered']
    #allocation9 [shape = 's32[1]{0}', space=sflag, size = 0x4, scoped, tag = 'scoped memory for tpu_custom_call.1']
    #allocation10 [shape = 'u8[65536]{0}', space=vmem, size = 0x10000, scoped, tag = 'input window, operand 7, single buffered']
    #allocation11 [shape = 'u8[4096]{0}', space=vmem, size = 0x1000, scoped, tag = 'output window, operand 0, single buffered']
    %14 = vsyncpa [#allocation3], 0
    %15 = vsyncpa [#allocation6], 0
    %16 = vsyncpa [#allocation9], 0
    %17 = vsyncpa [#allocation4], 0
    // Predicated region
    $region2: #{tpu_custom_call.1} parent=1 // pred_check
      _
    $region3: #{tpu_custom_call.1} parent=1 // pred_check_branch
      %19 = sbr.rel (0) target = $region5
    $region4: #{tpu_custom_call.1} parent=1 // pred_region
      %s21 = ssub.s32 128, 128
      %22 = vsyncadd [#allocation3], %s21
      %s24 = sshll.u32 [#allocation2], 4
      %s25 = int_to_ptr.vmem [resolvable:$true] %s24
      %27 = dma.hbm_to_vmem [thread:$0]  %s0, 128, %s25, [#allocation3]
    $region5: #{tpu_custom_call.1} parent=1 // pred_fallthru
      _
    // Predicated region
    $region6: #{tpu_custom_call.1} parent=1 // pred_check
      _
    $region7: #{tpu_custom_call.1} parent=1 // pred_check_branch
      %29 = sbr.rel (0) target = $region9
    $region8: #{tpu_custom_call.1} parent=1 // pred_region
      %s31 = ssub.s32 2048, 2048
      %32 = vsyncadd [#allocation6], %s31
      %s33 = sshll.u32 [#allocation5], 4
      %s34 = int_to_ptr.vmem [resolvable:$true] %s33
      %39 = dma.hbm_to_vmem [thread:$0]  %s1, 2048, %s34, [#allocation6], 128, 128, 8
    $region9: #{tpu_custom_call.1} parent=1 // pred_fallthru
      _
    // Predicated region
    $region10: #{tpu_custom_call.1} parent=1 // pred_check
      _
    $region11: #{tpu_custom_call.1} parent=1 // pred_check_branch
      %41 = sbr.rel (0) target = $region13
    $region12: #{tpu_custom_call.1} parent=1 // pred_region
      _
    $region13: #{tpu_custom_call.1} parent=1 // pred_fallthru
      _
    // Predicated region
    $region14: #{tpu_custom_call.1} parent=1 // pred_check
      _
    $region15: #{tpu_custom_call.1} parent=1 // pred_check_branch
      %43 = sbr.rel (0) target = $region17
    $region16: #{tpu_custom_call.1} parent=1 // pred_region
      %s45 = ssub.s32 4096, 4096
      %46 = vsyncadd [#allocation6], %s45
      %s47 = sshll.u32 [#allocation7], 4
      %s48 = int_to_ptr.vmem [resolvable:$true] %s47
      %53 = dma.hbm_to_vmem [thread:$0]  %s3, 4096, %s48, [#allocation6], 128, 128, 8
    $region17: #{tpu_custom_call.1} parent=1 // pred_fallthru
      _
    // Predicated region
    $region18: #{tpu_custom_call.1} parent=1 // pred_check
      _
    $region19: #{tpu_custom_call.1} parent=1 // pred_check_branch
      %55 = sbr.rel (0) target = $region21
    $region20: #{tpu_custom_call.1} parent=1 // pred_region
      _
    $region21: #{tpu_custom_call.1} parent=1 // pred_fallthru
      _
    // Predicated region
    $region22: #{tpu_custom_call.1} parent=1 // pred_check
      _
    $region23: #{tpu_custom_call.1} parent=1 // pred_check_branch
      %57 = sbr.rel (0) target = $region25
    $region24: #{tpu_custom_call.1} parent=1 // pred_region
      %s59 = ssub.s32 4096, 4096
      %60 = vsyncadd [#allocation9], %s59
      %s61 = sshll.u32 [#allocation8], 4
      %s62 = int_to_ptr.vmem [resolvable:$true] %s61
      %67 = dma.hbm_to_vmem [thread:$0]  %s5, 4096, %s62, [#allocation9], 128, 128, 8
    $region25: #{tpu_custom_call.1} parent=1 // pred_fallthru
      _
    // Predicated region
    $region26: #{tpu_custom_call.1} parent=1 // pred_check
      _
    $region27: #{tpu_custom_call.1} parent=1 // pred_check_branch
      %69 = sbr.rel (0) target = $region29
    $region28: #{tpu_custom_call.1} parent=1 // pred_region
      _
    $region29: #{tpu_custom_call.1} parent=1 // pred_fallthru
      _
    // Predicated region
    $region30: #{tpu_custom_call.1} parent=1 // pred_check
      _
    $region31: #{tpu_custom_call.1} parent=1 // pred_check_branch
      %71 = sbr.rel (0) target = $region33
    $region32: #{tpu_custom_call.1} parent=1 // pred_region
      %s73 = ssub.s32 2048, 2048
      %74 = vsyncadd [#allocation9], %s73
      %s75 = sshll.u32 [#allocation10], 4
      %s76 = int_to_ptr.vmem [resolvable:$true] %s75
      %81 = dma.hbm_to_vmem [thread:$0]  %s7, 2048, %s76, [#allocation9], 64, 64, 4
    $region33: #{tpu_custom_call.1} parent=1 // pred_fallthru
      _
    // Predicated region
    $region34: #{tpu_custom_call.1} parent=1 // pred_check
      _
    $region35: #{tpu_custom_call.1} parent=1 // pred_check_branch
      %83 = sbr.rel (0) target = $region37
    $region36: #{tpu_custom_call.1} parent=1 // pred_region
      _
    $region37: #{tpu_custom_call.1} parent=1 // pred_fallthru
      _
    // Predicated region
    $region38: #{tpu_custom_call.1} parent=1 // pred_check
      _
    $region39: #{tpu_custom_call.1} parent=1 // pred_check_branch
      %85 = sbr.rel (0) target = $region41
    $region40: #{tpu_custom_call.1} parent=1 // pred_region
      %86 = dma.done [#allocation3], 128
    $region41: #{tpu_custom_call.1} parent=1 // pred_fallthru
      _
    // Predicated region
    $region42: #{tpu_custom_call.1} parent=1 // pred_check
      _
    $region43: #{tpu_custom_call.1} parent=1 // pred_check_branch
      %88 = sbr.rel (0) target = $region45
    $region44: #{tpu_custom_call.1} parent=1 // pred_region
      %89 = dma.done [#allocation6], 2048
    $region45: #{tpu_custom_call.1} parent=1 // pred_fallthru
      _
    // Predicated region
    $region46: #{tpu_custom_call.1} parent=1 // pred_check
      _
    $region47: #{tpu_custom_call.1} parent=1 // pred_check_branch
      %91 = sbr.rel (0) target = $region49
    $region48: #{tpu_custom_call.1} parent=1 // pred_region
      %92 = dma.done [#allocation6], 4096
    $region49: #{tpu_custom_call.1} parent=1 // pred_fallthru
      _
    // Predicated region
    $region50: #{tpu_custom_call.1} parent=1 // pred_check
      _
    $region51: #{tpu_custom_call.1} parent=1 // pred_check_branch
      %94 = sbr.rel (0) target = $region53
    $region52: #{tpu_custom_call.1} parent=1 // pred_region
      %95 = dma.done [#allocation9], 4096
    $region53: #{tpu_custom_call.1} parent=1 // pred_fallthru
      _
    // Predicated region
    $region54: #{tpu_custom_call.1} parent=1 // pred_check
      _
    $region55: #{tpu_custom_call.1} parent=1 // pred_check_branch
      %97 = sbr.rel (0) target = $region57
    $region56: #{tpu_custom_call.1} parent=1 // pred_region
      %98 = dma.done [#allocation9], 2048
    $region57: #{tpu_custom_call.1} parent=1 // pred_fallthru
      _
    %v100 = vld [vmem:[#allocation2] sm:$0xff]
    %v101 = vpack.c.bf16 %v100, %v100
    %v102 = vld [vmem:[#allocation5] sm:$0xff]
    %v103 = vld [vmem:[#allocation5 + $0x8] sm:$0xff]
    %v104 = vld [vmem:[#allocation5 + $0x10] sm:$0xff]
    %v105 = vld [vmem:[#allocation5 + $0x18] sm:$0xff]
    %v106 = vld [vmem:[#allocation5 + $0x20] sm:$0xff]
    %v107 = vld [vmem:[#allocation5 + $0x28] sm:$0xff]
    %v108 = vld [vmem:[#allocation5 + $0x30] sm:$0xff]
    %v109 = vld [vmem:[#allocation5 + $0x38] sm:$0xff]
    %v110 = vld [vmem:[#allocation5 + $0x40] sm:$0xff]
    %v111 = vld [vmem:[#allocation5 + $0x48] sm:$0xff]
    %v112 = vld [vmem:[#allocation5 + $0x50] sm:$0xff]
    %v113 = vld [vmem:[#allocation5 + $0x58] sm:$0xff]
    %v114 = vld [vmem:[#allocation5 + $0x60] sm:$0xff]
    %v115 = vld [vmem:[#allocation5 + $0x68] sm:$0xff]
    %v116 = vld [vmem:[#allocation5 + $0x70] sm:$0xff]
    %v117 = vld [vmem:[#allocation5 + $0x78] sm:$0xff]
    %v118 = vld [vmem:[%s2] sm:$0x3]
    %v120 = vlaneseq
    %v121 = vshrl.u32 %v120, 7
    %v122 = vsub.s32 0, %v121
    %v123 = vrot.slane %v118, %v122
    %v124 = vlaneseq
    %v125 = vshrl.u32 %v124, 7
    %v126 = vsub.s32 1, %v125
    %v127 = vrot.slane %v118, %v126
    %v146 = vunpack.c.l.b16 %v102
    %v147 = vunpack.c.h.b16 %v102
    %v148 = vunpack.c.l.b16 %v103
    %v149 = vunpack.c.h.b16 %v103
    %v150 = vunpack.c.l.b16 %v104
    %v151 = vunpack.c.h.b16 %v104
    %v152 = vunpack.c.l.b16 %v105
    %v153 = vunpack.c.h.b16 %v105
    %v154 = vunpack.c.l.b16 %v106
    %v155 = vunpack.c.h.b16 %v106
    %v156 = vunpack.c.l.b16 %v107
    %v157 = vunpack.c.h.b16 %v107
    %v158 = vunpack.c.l.b16 %v108
    %v159 = vunpack.c.h.b16 %v108
    %v160 = vunpack.c.l.b16 %v109
    %v161 = vunpack.c.h.b16 %v109
    %v162 = vunpack.c.l.b16 %v110
    %v163 = vunpack.c.h.b16 %v110
    %v164 = vunpack.c.l.b16 %v111
    %v165 = vunpack.c.h.b16 %v111
    %v166 = vunpack.c.l.b16 %v112
    %v167 = vunpack.c.h.b16 %v112
    %v168 = vunpack.c.l.b16 %v113
    %v169 = vunpack.c.h.b16 %v113
    %v170 = vunpack.c.l.b16 %v114
    %v171 = vunpack.c.h.b16 %v114
    %v172 = vunpack.c.l.b16 %v115
    %v173 = vunpack.c.h.b16 %v115
    %v174 = vunpack.c.l.b16 %v116
    %v175 = vunpack.c.h.b16 %v116
    %v176 = vunpack.c.l.b16 %v117
    %v177 = vunpack.c.h.b16 %v117
    %v178 = vpack.c.b16 %v148, %v146
    %v179 = vpack.c.b16 %v149, %v147
    %v180 = vpack.c.b16 %v152, %v150
    %v181 = vpack.c.b16 %v153, %v151
    %v182 = vpack.c.b16 %v156, %v154
    %v183 = vpack.c.b16 %v157, %v155
    %v184 = vpack.c.b16 %v160, %v158
    %v185 = vpack.c.b16 %v161, %v159
    %v186 = vpack.c.b16 %v164, %v162
    %v187 = vpack.c.b16 %v165, %v163
    %v188 = vpack.c.b16 %v168, %v166
    %v189 = vpack.c.b16 %v169, %v167
    %v190 = vpack.c.b16 %v172, %v170
    %v191 = vpack.c.b16 %v173, %v171
    %v192 = vpack.c.b16 %v176, %v174
    %v193 = vpack.c.b16 %v177, %v175
    %210 = vmatprep.subr.bf16.mxu0 %v193
    %211 = vmatpush1.bf16.msra.mxu0 %v192
    %212 = vmatprep.subr.bf16.mxu0 %v191
    %213 = vmatpush1.bf16.msra.mxu0 %v190
    %214 = vmatprep.subr.bf16.mxu0 %v189
    %215 = vmatpush1.bf16.msra.mxu0 %v188
    %216 = vmatprep.subr.bf16.mxu0 %v187
    %217 = vmatpush1.bf16.msra.mxu0 %v186
    %218 = vmatprep.subr.bf16.mxu0 %v185
    %219 = vmatpush1.bf16.msra.mxu0 %v184
    %220 = vmatprep.subr.bf16.mxu0 %v183
    %221 = vmatpush1.bf16.msra.mxu0 %v182
    %222 = vmatprep.subr.bf16.mxu0 %v181
    %223 = vmatpush1.bf16.msra.mxu0 %v180
    %224 = vmatprep.subr.bf16.mxu0 %v179
    %225 = vmatpush1.bf16.msra.mxu0 %v178
    %226 = vmatprep.subr.bf16.mxu0 0
    %227 = vmatpush2.bf16.msra.mxu0 0
    %228 = vmatprep.subr.bf16.mxu0 0
    %229 = vmatpush2.bf16.msra.mxu0 0
    %230 = vmatprep.subr.bf16.mxu0 0
    %231 = vmatpush2.bf16.msra.mxu0 0
    %232 = vmatprep.subr.bf16.mxu0 0
    %233 = vmatpush2.bf16.msra.mxu0 0
    %234 = vmatprep.subr.bf16.mxu0 0
    %235 = vmatpush2.bf16.msra.mxu0 0
    %236 = vmatprep.subr.bf16.mxu0 0
    %237 = vmatpush2.bf16.msra.mxu0 0
    %238 = vmatprep.subr.bf16.mxu0 0
    %239 = vmatpush2.bf16.msra.mxu0 0
    %240 = vmatprep.subr.bf16.mxu0 0
    %241 = vmatpush2.bf16.msra.mxu0 0
    %242 = vmatprep.mubr.bf16.mxu0 0
    %243 = vmatmul.mubr.bf16.gmra.mxu0 %v101
    %v244 = vpop.f32.mrf.mxu0
    %v245 = vadd.f32 %v123, %v244
    %v246 = vpop.f32.mrf.mxu0
    %v247 = vadd.f32 %v127, %v246
    %v248 = vpop.f32.mrf.mxu0
    %v249 = vpop.f32.mrf.mxu0
    %250 = vdwg.mxu0
    %v251 = vmax.f32 %v245, 0.0
    %v252 = vmax.f32 %v247, 0.0
    %v253 = vpack.c.bf16 %v251, %v251
    %v254 = vpack.c.bf16 %v252, %v252
    %v255 = vld [vmem:[#allocation7] sm:$0xff]
    %v256 = vld [vmem:[#allocation7 + $0x8] sm:$0xff]
    %v257 = vld [vmem:[#allocation7 + $0x10] sm:$0xff]
    %v258 = vld [vmem:[#allocation7 + $0x18] sm:$0xff]
    %v259 = vld [vmem:[#allocation7 + $0x20] sm:$0xff]
    %v260 = vld [vmem:[#allocation7 + $0x28] sm:$0xff]
    %v261 = vld [vmem:[#allocation7 + $0x30] sm:$0xff]
    %v262 = vld [vmem:[#allocation7 + $0x38] sm:$0xff]
    %v263 = vld [vmem:[#allocation7 + $0x40] sm:$0xff]
    %v264 = vld [vmem:[#allocation7 + $0x48] sm:$0xff]
    %v265 = vld [vmem:[#allocation7 + $0x50] sm:$0xff]
    %v266 = vld [vmem:[#allocation7 + $0x58] sm:$0xff]
    %v267 = vld [vmem:[#allocation7 + $0x60] sm:$0xff]
    %v268 = vld [vmem:[#allocation7 + $0x68] sm:$0xff]
    %v269 = vld [vmem:[#allocation7 + $0x70] sm:$0xff]
    %v270 = vld [vmem:[#allocation7 + $0x78] sm:$0xff]
    %v271 = vld [vmem:[#allocation7 + $0x80] sm:$0xff]
    %v272 = vld [vmem:[#allocation7 + $0x88] sm:$0xff]
    %v273 = vld [vmem:[#allocation7 + $0x90] sm:$0xff]
    %v274 = vld [vmem:[#allocation7 + $0x98] sm:$0xff]
    %v275 = vld [vmem:[#allocation7 + $0xa0] sm:$0xff]
    %v276 = vld [vmem:[#allocation7 + $0xa8] sm:$0xff]
    %v277 = vld [vmem:[#allocation7 + $0xb0] sm:$0xff]
    %v278 = vld [vmem:[#allocation7 + $0xb8] sm:$0xff]
    %v279 = vld [vmem:[#allocation7 + $0xc0] sm:$0xff]
    %v280 = vld [vmem:[#allocation7 + $0xc8] sm:$0xff]
    %v281 = vld [vmem:[#allocation7 + $0xd0] sm:$0xff]
    %v282 = vld [vmem:[#allocation7 + $0xd8] sm:$0xff]
    %v283 = vld [vmem:[#allocation7 + $0xe0] sm:$0xff]
    %v284 = vld [vmem:[#allocation7 + $0xe8] sm:$0xff]
    %v285 = vld [vmem:[#allocation7 + $0xf0] sm:$0xff]
    %v286 = vld [vmem:[#allocation7 + $0xf8] sm:$0xff]
    %v287 = vld [vmem:[%s4] sm:$0x3]
    %v289 = vlaneseq
    %v290 = vshrl.u32 %v289, 7
    %v291 = vsub.s32 0, %v290
    %v292 = vrot.slane %v287, %v291
    %v293 = vlaneseq
    %v294 = vshrl.u32 %v293, 7
    %v295 = vsub.s32 1, %v294
    %v296 = vrot.slane %v287, %v295
    %v331 = vunpack.c.l.b16 %v255
    %v332 = vunpack.c.h.b16 %v255
    %v333 = vunpack.c.l.b16 %v256
    %v334 = vunpack.c.h.b16 %v256
    %v335 = vunpack.c.l.b16 %v257
    %v336 = vunpack.c.h.b16 %v257
    %v337 = vunpack.c.l.b16 %v258
    %v338 = vunpack.c.h.b16 %v258
    %v339 = vunpack.c.l.b16 %v259
    %v340 = vunpack.c.h.b16 %v259
    %v341 = vunpack.c.l.b16 %v260
    %v342 = vunpack.c.h.b16 %v260
    %v343 = vunpack.c.l.b16 %v261
    %v344 = vunpack.c.h.b16 %v261
    %v345 = vunpack.c.l.b16 %v262
    %v346 = vunpack.c.h.b16 %v262
    %v347 = vunpack.c.l.b16 %v263
    %v348 = vunpack.c.h.b16 %v263
    %v349 = vunpack.c.l.b16 %v264
    %v350 = vunpack.c.h.b16 %v264
    %v351 = vunpack.c.l.b16 %v265
    %v352 = vunpack.c.h.b16 %v265
    %v353 = vunpack.c.l.b16 %v266
    %v354 = vunpack.c.h.b16 %v266
    %v355 = vunpack.c.l.b16 %v267
    %v356 = vunpack.c.h.b16 %v267
    %v357 = vunpack.c.l.b16 %v268
    %v358 = vunpack.c.h.b16 %v268
    %v359 = vunpack.c.l.b16 %v269
    %v360 = vunpack.c.h.b16 %v269
    %v361 = vunpack.c.l.b16 %v270
    %v362 = vunpack.c.h.b16 %v270
    %v363 = vunpack.c.l.b16 %v271
    %v364 = vunpack.c.h.b16 %v271
    %v365 = vunpack.c.l.b16 %v272
    %v366 = vunpack.c.h.b16 %v272
    %v367 = vunpack.c.l.b16 %v273
    %v368 = vunpack.c.h.b16 %v273
    %v369 = vunpack.c.l.b16 %v274
    %v370 = vunpack.c.h.b16 %v274
    %v371 = vunpack.c.l.b16 %v275
    %v372 = vunpack.c.h.b16 %v275
    %v373 = vunpack.c.l.b16 %v276
    %v374 = vunpack.c.h.b16 %v276
    %v375 = vunpack.c.l.b16 %v277
    %v376 = vunpack.c.h.b16 %v277
    %v377 = vunpack.c.l.b16 %v278
    %v378 = vunpack.c.h.b16 %v278
    %v379 = vunpack.c.l.b16 %v279
    %v380 = vunpack.c.h.b16 %v279
    %v381 = vunpack.c.l.b16 %v280
    %v382 = vunpack.c.h.b16 %v280
    %v383 = vunpack.c.l.b16 %v281
    %v384 = vunpack.c.h.b16 %v281
    %v385 = vunpack.c.l.b16 %v282
    %v386 = vunpack.c.h.b16 %v282
    %v387 = vunpack.c.l.b16 %v283
    %v388 = vunpack.c.h.b16 %v283
    %v389 = vunpack.c.l.b16 %v284
    %v390 = vunpack.c.h.b16 %v284
    %v391 = vunpack.c.l.b16 %v285
    %v392 = vunpack.c.h.b16 %v285
    %v393 = vunpack.c.l.b16 %v286
    %v394 = vunpack.c.h.b16 %v286
    %v395 = vpack.c.b16 %v333, %v331
    %v396 = vpack.c.b16 %v334, %v332
    %v397 = vpack.c.b16 %v337, %v335
    %v398 = vpack.c.b16 %v338, %v336
    %v399 = vpack.c.b16 %v341, %v339
    %v400 = vpack.c.b16 %v342, %v340
    %v401 = vpack.c.b16 %v345, %v343
    %v402 = vpack.c.b16 %v346, %v344
    %v403 = vpack.c.b16 %v349, %v347
    %v404 = vpack.c.b16 %v350, %v348
    %v405 = vpack.c.b16 %v353, %v351
    %v406 = vpack.c.b16 %v354, %v352
    %v407 = vpack.c.b16 %v357, %v355
    %v408 = vpack.c.b16 %v358, %v356
    %v409 = vpack.c.b16 %v361, %v359
    %v410 = vpack.c.b16 %v362, %v360
    %v411 = vpack.c.b16 %v365, %v363
    %v412 = vpack.c.b16 %v366, %v364
    %v413 = vpack.c.b16 %v369, %v367
    %v414 = vpack.c.b16 %v370, %v368
    %v415 = vpack.c.b16 %v373, %v371
    %v416 = vpack.c.b16 %v374, %v372
    %v417 = vpack.c.b16 %v377, %v375
    %v418 = vpack.c.b16 %v378, %v376
    %v419 = vpack.c.b16 %v381, %v379
    %v420 = vpack.c.b16 %v382, %v380
    %v421 = vpack.c.b16 %v385, %v383
    %v422 = vpack.c.b16 %v386, %v384
    %v423 = vpack.c.b16 %v389, %v387
    %v424 = vpack.c.b16 %v390, %v388
    %v425 = vpack.c.b16 %v393, %v391
    %v426 = vpack.c.b16 %v394, %v392
    %459 = vmatprep.subr.bf16.mxu0 %v410
    %460 = vmatpush1.bf16.msra.mxu0 %v409
    %461 = vmatprep.subr.bf16.mxu0 %v408
    %462 = vmatpush1.bf16.msra.mxu0 %v407
    %463 = vmatprep.subr.bf16.mxu0 %v406
    %464 = vmatpush1.bf16.msra.mxu0 %v405
    %465 = vmatprep.subr.bf16.mxu0 %v404
    %466 = vmatpush1.bf16.msra.mxu0 %v403
    %467 = vmatprep.subr.bf16.mxu0 %v402
    %468 = vmatpush1.bf16.msra.mxu0 %v401
    %469 = vmatprep.subr.bf16.mxu0 %v400
    %470 = vmatpush1.bf16.msra.mxu0 %v399
    %471 = vmatprep.subr.bf16.mxu0 %v398
    %472 = vmatpush1.bf16.msra.mxu0 %v397
    %473 = vmatprep.subr.bf16.mxu0 %v396
    %474 = vmatpush1.bf16.msra.mxu0 %v395
    %475 = vmatprep.subr.bf16.mxu0 %v426
    %476 = vmatpush2.bf16.msra.mxu0 %v425
    %477 = vmatprep.subr.bf16.mxu0 %v424
    %478 = vmatpush2.bf16.msra.mxu0 %v423
    %479 = vmatprep.subr.bf16.mxu0 %v422
    %480 = vmatpush2.bf16.msra.mxu0 %v421
    %481 = vmatprep.subr.bf16.mxu0 %v420
    %482 = vmatpush2.bf16.msra.mxu0 %v419
    %483 = vmatprep.subr.bf16.mxu0 %v418
    %484 = vmatpush2.bf16.msra.mxu0 %v417
    %485 = vmatprep.subr.bf16.mxu0 %v416
    %486 = vmatpush2.bf16.msra.mxu0 %v415
    %487 = vmatprep.subr.bf16.mxu0 %v414
    %488 = vmatpush2.bf16.msra.mxu0 %v413
    %489 = vmatprep.subr.bf16.mxu0 %v412
    %490 = vmatpush2.bf16.msra.mxu0 %v411
    %491 = vmatprep.mubr.bf16.mxu0 %v254
    %492 = vmatmul.mubr.bf16.gmra.mxu0 %v253
    %v493 = vpop.f32.mrf.mxu0
    %v494 = vadd.f32 %v292, %v493
    %v495 = vpop.f32.mrf.mxu0
    %v496 = vadd.f32 %v296, %v495
    %v497 = vpop.f32.mrf.mxu0
    %v498 = vpop.f32.mrf.mxu0
    %499 = vdwg.mxu0
    %v500 = vmax.f32 %v494, 0.0
    %v501 = vmax.f32 %v496, 0.0
    %v502 = vpack.c.bf16 %v500, %v500
    %v503 = vpack.c.bf16 %v501, %v501
    %v504 = vld [vmem:[#allocation8] sm:$0xff]
    %v505 = vld [vmem:[#allocation8 + $0x8] sm:$0xff]
    %v506 = vld [vmem:[#allocation8 + $0x10] sm:$0xff]
    %v507 = vld [vmem:[#allocation8 + $0x18] sm:$0xff]
    %v508 = vld [vmem:[#allocation8 + $0x20] sm:$0xff]
    %v509 = vld [vmem:[#allocation8 + $0x28] sm:$0xff]
    %v510 = vld [vmem:[#allocation8 + $0x30] sm:$0xff]
    %v511 = vld [vmem:[#allocation8 + $0x38] sm:$0xff]
    %v512 = vld [vmem:[#allocation8 + $0x40] sm:$0xff]
    %v513 = vld [vmem:[#allocation8 + $0x48] sm:$0xff]
    %v514 = vld [vmem:[#allocation8 + $0x50] sm:$0xff]
    %v515 = vld [vmem:[#allocation8 + $0x58] sm:$0xff]
    %v516 = vld [vmem:[#allocation8 + $0x60] sm:$0xff]
    %v517 = vld [vmem:[#allocation8 + $0x68] sm:$0xff]
    %v518 = vld [vmem:[#allocation8 + $0x70] sm:$0xff]
    %v519 = vld [vmem:[#allocation8 + $0x78] sm:$0xff]
    %v520 = vld [vmem:[#allocation8 + $0x80] sm:$0xff]
    %v521 = vld [vmem:[#allocation8 + $0x88] sm:$0xff]
    %v522 = vld [vmem:[#allocation8 + $0x90] sm:$0xff]
    %v523 = vld [vmem:[#allocation8 + $0x98] sm:$0xff]
    %v524 = vld [vmem:[#allocation8 + $0xa0] sm:$0xff]
    %v525 = vld [vmem:[#allocation8 + $0xa8] sm:$0xff]
    %v526 = vld [vmem:[#allocation8 + $0xb0] sm:$0xff]
    %v527 = vld [vmem:[#allocation8 + $0xb8] sm:$0xff]
    %v528 = vld [vmem:[#allocation8 + $0xc0] sm:$0xff]
    %v529 = vld [vmem:[#allocation8 + $0xc8] sm:$0xff]
    %v530 = vld [vmem:[#allocation8 + $0xd0] sm:$0xff]
    %v531 = vld [vmem:[#allocation8 + $0xd8] sm:$0xff]
    %v532 = vld [vmem:[#allocation8 + $0xe0] sm:$0xff]
    %v533 = vld [vmem:[#allocation8 + $0xe8] sm:$0xff]
    %v534 = vld [vmem:[#allocation8 + $0xf0] sm:$0xff]
    %v535 = vld [vmem:[#allocation8 + $0xf8] sm:$0xff]
    %v536 = vld [vmem:[%s6] sm:$0x3]
    %v538 = vlaneseq
    %v539 = vshrl.u32 %v538, 7
    %v540 = vsub.s32 0, %v539
    %v541 = vrot.slane %v536, %v540
    %v542 = vlaneseq
    %v543 = vshrl.u32 %v542, 7
    %v544 = vsub.s32 1, %v543
    %v545 = vrot.slane %v536, %v544
    %v580 = vunpack.c.l.b16 %v504
    %v581 = vunpack.c.h.b16 %v504
    %v582 = vunpack.c.l.b16 %v505
    %v583 = vunpack.c.h.b16 %v505
    %v584 = vunpack.c.l.b16 %v506
    %v585 = vunpack.c.h.b16 %v506
    %v586 = vunpack.c.l.b16 %v507
    %v587 = vunpack.c.h.b16 %v507
    %v588 = vunpack.c.l.b16 %v508
    %v589 = vunpack.c.h.b16 %v508
    %v590 = vunpack.c.l.b16 %v509
    %v591 = vunpack.c.h.b16 %v509
    %v592 = vunpack.c.l.b16 %v510
    %v593 = vunpack.c.h.b16 %v510
    %v594 = vunpack.c.l.b16 %v511
    %v595 = vunpack.c.h.b16 %v511
    %v596 = vunpack.c.l.b16 %v512
    %v597 = vunpack.c.h.b16 %v512
    %v598 = vunpack.c.l.b16 %v513
    %v599 = vunpack.c.h.b16 %v513
    %v600 = vunpack.c.l.b16 %v514
    %v601 = vunpack.c.h.b16 %v514
    %v602 = vunpack.c.l.b16 %v515
    %v603 = vunpack.c.h.b16 %v515
    %v604 = vunpack.c.l.b16 %v516
    %v605 = vunpack.c.h.b16 %v516
    %v606 = vunpack.c.l.b16 %v517
    %v607 = vunpack.c.h.b16 %v517
    %v608 = vunpack.c.l.b16 %v518
    %v609 = vunpack.c.h.b16 %v518
    %v610 = vunpack.c.l.b16 %v519
    %v611 = vunpack.c.h.b16 %v519
    %v612 = vunpack.c.l.b16 %v520
    %v613 = vunpack.c.h.b16 %v520
    %v614 = vunpack.c.l.b16 %v521
    %v615 = vunpack.c.h.b16 %v521
    %v616 = vunpack.c.l.b16 %v522
    %v617 = vunpack.c.h.b16 %v522
    %v618 = vunpack.c.l.b16 %v523
    %v619 = vunpack.c.h.b16 %v523
    %v620 = vunpack.c.l.b16 %v524
    %v621 = vunpack.c.h.b16 %v524
    %v622 = vunpack.c.l.b16 %v525
    %v623 = vunpack.c.h.b16 %v525
    %v624 = vunpack.c.l.b16 %v526
    %v625 = vunpack.c.h.b16 %v526
    %v626 = vunpack.c.l.b16 %v527
    %v627 = vunpack.c.h.b16 %v527
    %v628 = vunpack.c.l.b16 %v528
    %v629 = vunpack.c.h.b16 %v528
    %v630 = vunpack.c.l.b16 %v529
    %v631 = vunpack.c.h.b16 %v529
    %v632 = vunpack.c.l.b16 %v530
    %v633 = vunpack.c.h.b16 %v530
    %v634 = vunpack.c.l.b16 %v531
    %v635 = vunpack.c.h.b16 %v531
    %v636 = vunpack.c.l.b16 %v532
    %v637 = vunpack.c.h.b16 %v532
    %v638 = vunpack.c.l.b16 %v533
    %v639 = vunpack.c.h.b16 %v533
    %v640 = vunpack.c.l.b16 %v534
    %v641 = vunpack.c.h.b16 %v534
    %v642 = vunpack.c.l.b16 %v535
    %v643 = vunpack.c.h.b16 %v535
    %v644 = vpack.c.b16 %v582, %v580
    %v645 = vpack.c.b16 %v583, %v581
    %v646 = vpack.c.b16 %v586, %v584
    %v647 = vpack.c.b16 %v587, %v585
    %v648 = vpack.c.b16 %v590, %v588
    %v649 = vpack.c.b16 %v591, %v589
    %v650 = vpack.c.b16 %v594, %v592
    %v651 = vpack.c.b16 %v595, %v593
    %v652 = vpack.c.b16 %v598, %v596
    %v653 = vpack.c.b16 %v599, %v597
    %v654 = vpack.c.b16 %v602, %v600
    %v655 = vpack.c.b16 %v603, %v601
    %v656 = vpack.c.b16 %v606, %v604
    %v657 = vpack.c.b16 %v607, %v605
    %v658 = vpack.c.b16 %v610, %v608
    %v659 = vpack.c.b16 %v611, %v609
    %v660 = vpack.c.b16 %v614, %v612
    %v661 = vpack.c.b16 %v615, %v613
    %v662 = vpack.c.b16 %v618, %v616
    %v663 = vpack.c.b16 %v619, %v617
    %v664 = vpack.c.b16 %v622, %v620
    %v665 = vpack.c.b16 %v623, %v621
    %v666 = vpack.c.b16 %v626, %v624
    %v667 = vpack.c.b16 %v627, %v625
    %v668 = vpack.c.b16 %v630, %v628
    %v669 = vpack.c.b16 %v631, %v629
    %v670 = vpack.c.b16 %v634, %v632
    %v671 = vpack.c.b16 %v635, %v633
    %v672 = vpack.c.b16 %v638, %v636
    %v673 = vpack.c.b16 %v639, %v637
    %v674 = vpack.c.b16 %v642, %v640
    %v675 = vpack.c.b16 %v643, %v641
    %708 = vmatprep.subr.bf16.mxu0 %v659
    %709 = vmatpush1.bf16.msra.mxu0 %v658
    %710 = vmatprep.subr.bf16.mxu0 %v657
    %711 = vmatpush1.bf16.msra.mxu0 %v656
    %712 = vmatprep.subr.bf16.mxu0 %v655
    %713 = vmatpush1.bf16.msra.mxu0 %v654
    %714 = vmatprep.subr.bf16.mxu0 %v653
    %715 = vmatpush1.bf16.msra.mxu0 %v652
    %716 = vmatprep.subr.bf16.mxu0 %v651
    %717 = vmatpush1.bf16.msra.mxu0 %v650
    %718 = vmatprep.subr.bf16.mxu0 %v649
    %719 = vmatpush1.bf16.msra.mxu0 %v648
    %720 = vmatprep.subr.bf16.mxu0 %v647
    %721 = vmatpush1.bf16.msra.mxu0 %v646
    %722 = vmatprep.subr.bf16.mxu0 %v645
    %723 = vmatpush1.bf16.msra.mxu0 %v644
    %724 = vmatprep.subr.bf16.mxu0 %v675
    %725 = vmatpush2.bf16.msra.mxu0 %v674
    %726 = vmatprep.subr.bf16.mxu0 %v673
    %727 = vmatpush2.bf16.msra.mxu0 %v672
    %728 = vmatprep.subr.bf16.mxu0 %v671
    %729 = vmatpush2.bf16.msra.mxu0 %v670
    %730 = vmatprep.subr.bf16.mxu0 %v669
    %731 = vmatpush2.bf16.msra.mxu0 %v668
    %732 = vmatprep.subr.bf16.mxu0 %v667
    %733 = vmatpush2.bf16.msra.mxu0 %v666
    %734 = vmatprep.subr.bf16.mxu0 %v665
    %735 = vmatpush2.bf16.msra.mxu0 %v664
    %736 = vmatprep.subr.bf16.mxu0 %v663
    %737 = vmatpush2.bf16.msra.mxu0 %v662
    %738 = vmatprep.subr.bf16.mxu0 %v661
    %739 = vmatpush2.bf16.msra.mxu0 %v660
    %740 = vmatprep.mubr.bf16.mxu0 %v503
    %741 = vmatmul.mubr.bf16.gmra.mxu0 %v502
    %v742 = vpop.f32.mrf.mxu0
    %v743 = vadd.f32 %v541, %v742
    %v744 = vpop.f32.mrf.mxu0
    %v745 = vadd.f32 %v545, %v744
    %v746 = vpop.f32.mrf.mxu0
    %v747 = vpop.f32.mrf.mxu0
    %748 = vdwg.mxu0
    %v749 = vmax.f32 %v743, 0.0
    %v750 = vmax.f32 %v745, 0.0
    %v751 = vpack.c.bf16 %v749, %v749
    %v752 = vpack.c.bf16 %v750, %v750
    %v753 = vld [vmem:[#allocation10] sm:$0xf]
    %v754 = vld [vmem:[#allocation10 + $0x4] sm:$0xf]
    %v755 = vld [vmem:[#allocation10 + $0x8] sm:$0xf]
    %v756 = vld [vmem:[#allocation10 + $0xc] sm:$0xf]
    %v757 = vld [vmem:[#allocation10 + $0x10] sm:$0xf]
    %v758 = vld [vmem:[#allocation10 + $0x14] sm:$0xf]
    %v759 = vld [vmem:[#allocation10 + $0x18] sm:$0xf]
    %v760 = vld [vmem:[#allocation10 + $0x1c] sm:$0xf]
    %v761 = vld [vmem:[#allocation10 + $0x20] sm:$0xf]
    %v762 = vld [vmem:[#allocation10 + $0x24] sm:$0xf]
    %v763 = vld [vmem:[#allocation10 + $0x28] sm:$0xf]
    %v764 = vld [vmem:[#allocation10 + $0x2c] sm:$0xf]
    %v765 = vld [vmem:[#allocation10 + $0x30] sm:$0xf]
    %v766 = vld [vmem:[#allocation10 + $0x34] sm:$0xf]
    %v767 = vld [vmem:[#allocation10 + $0x38] sm:$0xf]
    %v768 = vld [vmem:[#allocation10 + $0x3c] sm:$0xf]
    %v769 = vld [vmem:[#allocation10 + $0x40] sm:$0xf]
    %v770 = vld [vmem:[#allocation10 + $0x44] sm:$0xf]
    %v771 = vld [vmem:[#allocation10 + $0x48] sm:$0xf]
    %v772 = vld [vmem:[#allocation10 + $0x4c] sm:$0xf]
    %v773 = vld [vmem:[#allocation10 + $0x50] sm:$0xf]
    %v774 = vld [vmem:[#allocation10 + $0x54] sm:$0xf]
    %v775 = vld [vmem:[#allocation10 + $0x58] sm:$0xf]
    %v776 = vld [vmem:[#allocation10 + $0x5c] sm:$0xf]
    %v777 = vld [vmem:[#allocation10 + $0x60] sm:$0xf]
    %v778 = vld [vmem:[#allocation10 + $0x64] sm:$0xf]
    %v779 = vld [vmem:[#allocation10 + $0x68] sm:$0xf]
    %v780 = vld [vmem:[#allocation10 + $0x6c] sm:$0xf]
    %v781 = vld [vmem:[#allocation10 + $0x70] sm:$0xf]
    %v782 = vld [vmem:[#allocation10 + $0x74] sm:$0xf]
    %v783 = vld [vmem:[#allocation10 + $0x78] sm:$0xf]
    %v784 = vld [vmem:[#allocation10 + $0x7c] sm:$0xf]
    %v785 = vld [vmem:[%s8] sm:$0x1]
    %v787 = vlaneseq
    %v788 = vshrl.u32 %v787, 7
    %v789 = vsub.s32 0, %v788
    %v790 = vrot.slane %v785, %v789
    %v824 = vunpack.c.l.b16 %v753
    %v825 = vunpack.c.l.b16 %v754
    %v826 = vunpack.c.l.b16 %v755
    %v827 = vunpack.c.l.b16 %v756
    %v828 = vunpack.c.l.b16 %v757
    %v829 = vunpack.c.l.b16 %v758
    %v830 = vunpack.c.l.b16 %v759
    %v831 = vunpack.c.l.b16 %v760
    %v832 = vunpack.c.l.b16 %v761
    %v833 = vunpack.c.l.b16 %v762
    %v834 = vunpack.c.l.b16 %v763
    %v835 = vunpack.c.l.b16 %v764
    %v836 = vunpack.c.l.b16 %v765
    %v837 = vunpack.c.l.b16 %v766
    %v838 = vunpack.c.l.b16 %v767
    %v839 = vunpack.c.l.b16 %v768
    %v840 = vunpack.c.l.b16 %v769
    %v841 = vunpack.c.l.b16 %v770
    %v842 = vunpack.c.l.b16 %v771
    %v843 = vunpack.c.l.b16 %v772
    %v844 = vunpack.c.l.b16 %v773
    %v845 = vunpack.c.l.b16 %v774
    %v846 = vunpack.c.l.b16 %v775
    %v847 = vunpack.c.l.b16 %v776
    %v848 = vunpack.c.l.b16 %v777
    %v849 = vunpack.c.l.b16 %v778
    %v850 = vunpack.c.l.b16 %v779
    %v851 = vunpack.c.l.b16 %v780
    %v852 = vunpack.c.l.b16 %v781
    %v853 = vunpack.c.l.b16 %v782
    %v854 = vunpack.c.l.b16 %v783
    %v855 = vunpack.c.l.b16 %v784
    %v856 = vpack.c.b16 %v825, %v824
    %v857 = vpack.c.b16 %v827, %v826
    %v858 = vpack.c.b16 %v829, %v828
    %v859 = vpack.c.b16 %v831, %v830
    %v860 = vpack.c.b16 %v833, %v832
    %v861 = vpack.c.b16 %v835, %v834
    %v862 = vpack.c.b16 %v837, %v836
    %v863 = vpack.c.b16 %v839, %v838
    %v864 = vpack.c.b16 %v841, %v840
    %v865 = vpack.c.b16 %v843, %v842
    %v866 = vpack.c.b16 %v845, %v844
    %v867 = vpack.c.b16 %v847, %v846
    %v868 = vpack.c.b16 %v849, %v848
    %v869 = vpack.c.b16 %v851, %v850
    %v870 = vpack.c.b16 %v853, %v852
    %v871 = vpack.c.b16 %v855, %v854
    %888 = vmatprep.subr.bf16.mxu0 0
    %889 = vmatpush1.bf16.msra.mxu0 %v863
    %890 = vmatprep.subr.bf16.mxu0 0
    %891 = vmatpush1.bf16.msra.mxu0 %v862
    %892 = vmatprep.subr.bf16.mxu0 0
    %893 = vmatpush1.bf16.msra.mxu0 %v861
    %894 = vmatprep.subr.bf16.mxu0 0
    %895 = vmatpush1.bf16.msra.mxu0 %v860
    %896 = vmatprep.subr.bf16.mxu0 0
    %897 = vmatpush1.bf16.msra.mxu0 %v859
    %898 = vmatprep.subr.bf16.mxu0 0
    %899 = vmatpush1.bf16.msra.mxu0 %v858
    %900 = vmatprep.subr.bf16.mxu0 0
    %901 = vmatpush1.bf16.msra.mxu0 %v857
    %902 = vmatprep.subr.bf16.mxu0 0
    %903 = vmatpush1.bf16.msra.mxu0 %v856
    %904 = vmatprep.subr.bf16.mxu0 0
    %905 = vmatpush2.bf16.msra.mxu0 %v871
    %906 = vmatprep.subr.bf16.mxu0 0
    %907 = vmatpush2.bf16.msra.mxu0 %v870
    %908 = vmatprep.subr.bf16.mxu0 0
    %909 = vmatpush2.bf16.msra.mxu0 %v869
    %910 = vmatprep.subr.bf16.mxu0 0
    %911 = vmatpush2.bf16.msra.mxu0 %v868
    %912 = vmatprep.subr.bf16.mxu0 0
    %913 = vmatpush2.bf16.msra.mxu0 %v867
    %914 = vmatprep.subr.bf16.mxu0 0
    %915 = vmatpush2.bf16.msra.mxu0 %v866
    %916 = vmatprep.subr.bf16.mxu0 0
    %917 = vmatpush2.bf16.msra.mxu0 %v865
    %918 = vmatprep.subr.bf16.mxu0 0
    %919 = vmatpush2.bf16.msra.mxu0 %v864
    %920 = vmatprep.mubr.bf16.mxu0 %v752
    %921 = vmatmul.mubr.bf16.gmra.mxu0 %v751
    %v922 = vpop.f32.mrf.mxu0
    %v923 = vadd.f32 %v790, %v922
    %v924 = vpop.f32.mrf.mxu0
    %v925 = vpop.f32.mrf.mxu0
    %v926 = vpop.f32.mrf.mxu0
    %927 = vdwg.mxu0
    %v928 = vtanh.pop %v923
    %v929 = vmul.f32 %v928, 0.05
    %v930 = vadd.f32 %v100, %v929
    %v931 = vmax.f32 %v930, -1.0
    %v932 = vmin.f32 %v931, 1.0
    %933 = vst [vmem:[#allocation11] sm:$0xff] %v932
    // Predicated region
    $region58: #{tpu_custom_call.1} parent=1 // pred_check
      _
    $region59: #{tpu_custom_call.1} parent=1 // pred_check_branch
      %935 = sbr.rel (0) target = $region61
    $region60: #{tpu_custom_call.1} parent=1 // pred_region
      %s937 = ssub.s32 128, 128
      %938 = vsyncadd [#allocation4], %s937
      %s940 = sshll.u32 [#allocation11], 4
      %s941 = int_to_ptr.vmem [resolvable:$true] %s940
      %943 = dma.vmem_to_hbm [thread:$0]  %s941, 128, %s9, [#allocation4]
    $region61: #{tpu_custom_call.1} parent=1 // pred_fallthru
      _
    // Predicated region
    $region62: #{tpu_custom_call.1} parent=1 // pred_check
      _
    $region63: #{tpu_custom_call.1} parent=1 // pred_check_branch
      %945 = sbr.rel (0) target = $region65
    $region64: #{tpu_custom_call.1} parent=1 // pred_region
      %946 = dma.done [#allocation4], 128
    $region65: #{tpu_custom_call.1} parent=1 // pred_fallthru
      _
    %947 = vsyncpa [#allocation3], 1
    %948 = vsyncpa [#allocation6], 1
    %949 = vsyncpa [#allocation9], 1
    %950 = vsyncpa [#allocation4], 1

</llo_original>
